<compile_context>
chip_gen: v7x
topology: tpu7x:2x2x1
jax: 0.10.0
libtpu: 0.0.40
codegen_flags: <defaults>
</compile_context>

<pallas_src>
import jax
import jax.numpy as jnp
from jax.experimental import pallas as pl
from jax.experimental.pallas import tpu as pltpu


def mlp_kernel(xT_ref, wpack_ref, b2_ref, oT_ref):
    # xT    : (1, Npad)        batch on the lane axis
    # wpack : (n_hidden, 3)    columns = [hidden.weight | hidden.bias | predict.weight^T]
    # b2    : (1, 1) in SMEM   predict.bias (scalar)
    # oT    : (1, Npad)        batch on the lane axis (lane-dense, unmasked store)
    x = xT_ref[...]                                       # (1, Npad)

    # Static column views of the packed parameter tile (free, same lane tile).
    w1 = wpack_ref[:, 0:1]                                # (H, 1)
    b1 = wpack_ref[:, 1:2]                                # (H, 1)
    w2 = wpack_ref[:, 2:3]                                # (H, 1)

    # hidden = relu(x @ W1.T + b1); n_feature == 1 -> outer product:
    # pure VPU broadcast multiply-add, no MXU push/pop.
    h = jnp.maximum(w1 * x + b1, 0.0)                     # (H,1)*(1,N)+(H,1) -> (H,N)

    # predict = h @ W2.T + b2; n_output == 1 -> elementwise multiply + cross-
    # sublane reduce (XLU); scalar bias from SMEM folded into the same store.
    oT_ref[...] = jnp.sum(w2 * h, axis=0, keepdims=True) + b2_ref[0, 0]


def prepare_params(w1, b1, w2, b2):
    """One-time repack of PyTorch-layout params into the kernel-native layout.

    w1: (n_hidden, 1) hidden.weight   b1: (n_hidden,) hidden.bias
    w2: (1, n_hidden) predict.weight  b2: (1,)        predict.bias
    Returns (wpack (n_hidden, 3) f32, b2s (1, 1) f32).
    """
    n_hidden = w1.shape[0]
    wpack = jnp.concatenate(
        [w1.reshape(n_hidden, 1),
         b1.reshape(n_hidden, 1),
         w2.reshape(n_hidden, 1)],          # (1, H) -> (H, 1)
        axis=1,
    ).astype(jnp.float32)
    b2s = b2.reshape(1, 1).astype(jnp.float32)
    return wpack, b2s


@jax.jit
def net_forward(x, wpack, b2s):
    """Forward pass matching the PyTorch Net.  x: (N, 1) f32 -> (N, 1) f32.

    Note: Npad is derived from x.shape, so a different batch size recompiles
    the pallas_call (performance, not correctness).
    """
    n = x.shape[0]
    n_pad = ((n + 127) // 128) * 128        # lane-align the batch (100 -> 128)

    # Batch on lanes, zero-padded with a single pad op (fuses under jit).
    xT = jnp.pad(x.astype(jnp.float32).reshape(1, n), ((0, 0), (0, n_pad - n)))

    yT = pl.pallas_call(
        mlp_kernel,
        out_shape=jax.ShapeDtypeStruct((1, n_pad), jnp.float32),
        in_specs=[
            pl.BlockSpec(memory_space=pltpu.MemorySpace.VMEM),   # xT
            pl.BlockSpec(memory_space=pltpu.MemorySpace.VMEM),   # packed w1|b1|w2
            pl.BlockSpec(memory_space=pltpu.MemorySpace.SMEM),   # b2 (scalar)
        ],
        out_specs=pl.BlockSpec(memory_space=pltpu.MemorySpace.VMEM),
    )(xT, wpack, b2s)

    # Padded lanes carry relu(b1)·w2 + b2 garbage; slice them off.
    return yT[0, :n].reshape(n, 1)


def init_params(key, n_feature, n_hidden, n_output):
    """Deterministic PyTorch-style init: U(-1/sqrt(fan_in), 1/sqrt(fan_in)),
    with PyTorch nn.Linear weight shapes (out_features, in_features)."""
    k1, k2, k3, k4 = jax.random.split(key, 4)
    lim1 = 1.0 / jnp.sqrt(jnp.float32(n_feature))
    lim2 = 1.0 / jnp.sqrt(jnp.float32(n_hidden))
    w1 = jax.random.uniform(k1, (n_hidden, n_feature), jnp.float32, -lim1, lim1)
    b1 = jax.random.uniform(k2, (n_hidden,), jnp.float32, -lim1, lim1)
    w2 = jax.random.uniform(k3, (n_output, n_hidden), jnp.float32, -lim2, lim2)
    b2 = jax.random.uniform(k4, (n_output,), jnp.float32, -lim2, lim2)
    return w1, b1, w2, b2


if __name__ == "__main__":
    n_feature, n_hidden, n_output = 1, 32, 1
    batch = 100

    key = jax.random.PRNGKey(0)
    w1, b1, w2, b2 = init_params(key, n_feature, n_hidden, n_output)

    # Hoisted one-time repack into kernel-native layout.
    wpack, b2s = prepare_params(w1, b1, w2, b2)

    # x = torch.unsqueeze(torch.linspace(-1, 1, 100), dim=1) -> shape (100, 1)
    x = jnp.linspace(-1.0, 1.0, batch, dtype=jnp.float32).reshape(batch, 1)

    out = jax.block_until_ready(net_forward(x, wpack, b2s))

    # Reference in plain JAX (PyTorch semantics: x @ W.T + b).
    ref = jnp.maximum(x @ w1.T + b1, 0.0) @ w2.T + b2
    assert out.shape == (batch, n_output)
    assert jnp.allclose(out, ref, atol=1e-5, rtol=1e-5)

    print("KERNEL_OK")
</pallas_src>

<mosaic_0001>
module attributes {stable_mosaic.version = 11 : i64} {
  func.func @mlp_kernel(%arg0: memref<1x128xf32, #tpu.memory_space<vmem>>, %arg1: memref<32x3xf32, #tpu.memory_space<vmem>>, %arg2: memref<1x1xf32, #tpu.memory_space<smem>>, %arg3: memref<1x128xf32, #tpu.memory_space<vmem>>) attributes {dimension_semantics = [], scalar_prefetch = 0 : i64, scratch_operands = 0 : i64, tpu.core_type = #tpu.core_type<tc>} {
    %c0 = arith.constant 0 : index
    %c0_0 = arith.constant 0 : index
    %0 = vector.load %arg0[%c0, %c0_0] : memref<1x128xf32, #tpu.memory_space<vmem>>, vector<1x128xf32>
    %c0_1 = arith.constant 0 : index
    %c0_2 = arith.constant 0 : index
    %1 = vector.load %arg1[%c0_1, %c0_2] : memref<32x3xf32, #tpu.memory_space<vmem>>, vector<32x1xf32>
    %c0_3 = arith.constant 0 : index
    %c1 = arith.constant 1 : index
    %2 = vector.load %arg1[%c0_3, %c1] : memref<32x3xf32, #tpu.memory_space<vmem>>, vector<32x1xf32>
    %c0_4 = arith.constant 0 : index
    %c2 = arith.constant 2 : index
    %3 = vector.load %arg1[%c0_4, %c2] : memref<32x3xf32, #tpu.memory_space<vmem>>, vector<32x1xf32>
    %4 = vector.broadcast %1 : vector<32x1xf32> to vector<32x128xf32>
    %5 = vector.broadcast %0 : vector<1x128xf32> to vector<32x128xf32>
    %6 = arith.mulf %4, %5 : vector<32x128xf32>
    %7 = vector.broadcast %2 : vector<32x1xf32> to vector<32x128xf32>
    %8 = arith.addf %6, %7 : vector<32x128xf32>
    %cst = arith.constant 0.000000e+00 : f32
    %9 = vector.broadcast %cst : f32 to vector<32x128xf32>
    %10 = arith.maximumf %8, %9 : vector<32x128xf32>
    %11 = vector.broadcast %3 : vector<32x1xf32> to vector<32x128xf32>
    %12 = arith.mulf %11, %10 : vector<32x128xf32>
    %cst_5 = arith.constant dense<0.000000e+00> : vector<128xf32>
    %13 = vector.multi_reduction <add>, %12, %cst_5 [0] : vector<32x128xf32> to vector<128xf32>
    %14 = vector.shape_cast %13 : vector<128xf32> to vector<1x128xf32>
    %c0_6 = arith.constant 0 : index
    %c0_7 = arith.constant 0 : index
    %15 = memref.load %arg2[%c0_6, %c0_7] : memref<1x1xf32, #tpu.memory_space<smem>>
    %16 = vector.broadcast %15 : f32 to vector<1x128xf32>
    %17 = arith.addf %14, %16 : vector<1x128xf32>
    %c0_8 = arith.constant 0 : index
    %c0_9 = arith.constant 0 : index
    %18 = vector.load %arg3[%c0_8, %c0_9] : memref<1x128xf32, #tpu.memory_space<vmem>>, vector<1x128xf32>
    tpu.vector_store %arg3[%c0_8, %c0_9], %17 {strides = array<i32>} : memref<1x128xf32, #tpu.memory_space<vmem>>, vector<1x128xf32>,
    return
  }
}

</mosaic_0001>

<llo_original>
// kernel: net_forward.1
$region0: #{net_forward.1}
  #allocation0 [shape = 'u32[]', space=smem, size = 0x4, offset = 0x4, fixed_abs, tag = 'smem constant byte address 0x4 - core index']
  #allocation1 [shape = 'u32[144,128]{1,0:T(1,128)}', space=vmem, size = 0x12000, scoped, tag = 'internal scratch']
  #allocation2 [shape = 'f32[1,1]{1,0:T(1,128)S(6)}', space=smem, size = 0x200, scoped, tag = 'scoped memory for net_forward.1']
  %s0 = inlined_call_operand.vmem [shape: f32[1,128], index: 0, kind: input, shape index: {}]
  %s1 = inlined_call_operand.vmem [shape: f32[32,3], index: 1, kind: input, shape index: {}]
  %s2 = inlined_call_operand.<no memory space> [shape: f32[1,1], index: 2, kind: input, shape index: {}]
  %s3 = inlined_call_operand.vmem [shape: f32[1,128], index: 3, kind: output, shape index: {}]
  %s4 = sld [smem:[#allocation0]]
  $region22: #{net_forward.1} parent=0
    _
  %s6 = ssub.s32 1, %s4
  %s7 = scalar_select 0, %s6, %s4
  %8 = sst [smem:[#allocation2]] %s2
  // Predicated region
  $region2: #{net_forward.1} parent=0 // pred_check
    _
  $region3: #{net_forward.1} parent=0 // pred_check_branch
    %10 = sbr.rel (0) target = $region5
  $region4: #{net_forward.1} parent=0 // pred_region
    _
  $region5: #{net_forward.1} parent=0 // pred_fallthru
    _
  // Predicated region
  $region6: #{net_forward.1} parent=0 // pred_check
    _
  $region7: #{net_forward.1} parent=0 // pred_check_branch
    %12 = sbr.rel (0) target = $region9
  $region8: #{net_forward.1} parent=0 // pred_region
    _
  $region9: #{net_forward.1} parent=0 // pred_fallthru
    _
  // Predicated region
  $region10: #{net_forward.1} parent=0 // pred_check
    _
  $region11: #{net_forward.1} parent=0 // pred_check_branch
    %14 = sbr.rel (0) target = $region13
  $region12: #{net_forward.1} parent=0 // pred_region
    _
  $region13: #{net_forward.1} parent=0 // pred_fallthru
    _
  %v15 = vld [vmem:[%s0] sm:$0x1]
  %v16 = vld [vmem:[%s1] sm:$0xff]
  %v17 = vld [vmem:[%s1 + $0x8] sm:$0xff]
  %v18 = vld [vmem:[%s1 + $0x10] sm:$0xff]
  %v19 = vld [vmem:[%s1 + $0x18] sm:$0xff]
  %21 = vset.pattern.permute.xlu0 0
  %22 = vperm.xlu0 %21, %v16
  %v23 = vpop.permute.xlu0 %22
  %26 = vset.pattern.permute.xlu0 0
  %27 = vperm.xlu0 %26, %v17
  %v28 = vpop.permute.xlu0 %27
  %31 = vset.pattern.permute.xlu0 0
  %32 = vperm.xlu0 %31, %v18
  %v33 = vpop.permute.xlu0 %32
  %36 = vset.pattern.permute.xlu0 0
  %37 = vperm.xlu0 %36, %v19
  %v38 = vpop.permute.xlu0 %37
  %v41 = vlaneseq
  %v42 = vshrl.u32 %v41, 7
  %v43 = vsub.s32 0, %v42
  %v44 = vrot.slane %v15, %v43
  %v46 = vmul.f32 %v23, %v44
  %v47 = vmul.f32 %v28, %v44
  %v48 = vmul.f32 %v33, %v44
  %v49 = vmul.f32 %v38, %v44
  %50 = vset.pattern.permute.xlu0 1
  %51 = vperm.xlu0 %50, %v16
  %v52 = vpop.permute.xlu0 %51
  %54 = vset.pattern.permute.xlu0 1
  %55 = vperm.xlu0 %54, %v17
  %v56 = vpop.permute.xlu0 %55
  %58 = vset.pattern.permute.xlu0 1
  %59 = vperm.xlu0 %58, %v18
  %v60 = vpop.permute.xlu0 %59
  %62 = vset.pattern.permute.xlu0 1
  %63 = vperm.xlu0 %62, %v19
  %v64 = vpop.permute.xlu0 %63
  %v66 = vadd.f32 %v46, %v52
  %v67 = vadd.f32 %v47, %v56
  %v68 = vadd.f32 %v48, %v60
  %v69 = vadd.f32 %v49, %v64
  %v70 = vmax.f32 %v66, 0.0
  %v71 = vmax.f32 %v67, 0.0
  %v72 = vmax.f32 %v68, 0.0
  %v73 = vmax.f32 %v69, 0.0
  %74 = vset.pattern.permute.xlu0 2
  %75 = vperm.xlu0 %74, %v16
  %v76 = vpop.permute.xlu0 %75
  %78 = vset.pattern.permute.xlu0 2
  %79 = vperm.xlu0 %78, %v17
  %v80 = vpop.permute.xlu0 %79
  %82 = vset.pattern.permute.xlu0 2
  %83 = vperm.xlu0 %82, %v18
  %v84 = vpop.permute.xlu0 %83
  %86 = vset.pattern.permute.xlu0 2
  %87 = vperm.xlu0 %86, %v19
  %v88 = vpop.permute.xlu0 %87
  %v90 = vmul.f32 %v76, %v70
  %v91 = vmul.f32 %v80, %v71
  %v92 = vmul.f32 %v84, %v72
  %v93 = vmul.f32 %v88, %v73
  %v94 = vadd.f32 %v90, %v91
  %v95 = vadd.f32 %v94, %v92
  %v96 = vadd.f32 %v95, %v93
  %v97 = vrot.slane %v96, 4
  %v98 = vadd.f32 %v96, %v97
  %v99 = vrot.slane %v98, 2
  %v100 = vadd.f32 %v98, %v99
  %v101 = vrot.slane %v100, 1
  %v102 = vadd.f32 %v100, %v101
  %s103 = sld [smem:[#allocation2]]
  %v104 = vstv %s103
  %v105 = vadd.f32 %v102, %v104
  %106 = vst [vmem:[%s3] sm:$0x1] %v105
  // Predicated region
  $region14: #{net_forward.1} parent=0 // pred_check
    _
  $region15: #{net_forward.1} parent=0 // pred_check_branch
    %108 = sbr.rel (0) target = $region17
  $region16: #{net_forward.1} parent=0 // pred_region
    _
  $region17: #{net_forward.1} parent=0 // pred_fallthru
    _
  // Predicated region
  $region18: #{net_forward.1} parent=0 // pred_check
    _
  $region19: #{net_forward.1} parent=0 // pred_check_branch
    %110 = sbr.rel (0) target = $region21
  $region20: #{net_forward.1} parent=0 // pred_region
    _
  $region21: #{net_forward.1} parent=0 // pred_fallthru
    _

</llo_original>
